<compile_context>
chip_gen: v6e
topology: v6e:2x2x1
jax: 0.10.0
libtpu: 0.0.40
codegen_flags: <defaults>
</compile_context>

<pallas_src>
import functools
import math

import jax
import jax.numpy as jnp
from jax.experimental import pallas as pl
from jax.experimental.pallas import tpu as pltpu


# ----------------------------------------------------------------------------
# Helpers
# ----------------------------------------------------------------------------

def _round_up(x, m):
    return -(-x // m) * m


@functools.lru_cache(maxsize=1)
def _vmem_budget():
    """Usable scoped-VMEM budget: ~85% of physical VMEM on this generation."""
    try:
        cap = int(pltpu.get_tpu_info().vmem_capacity_bytes)
    except Exception:
        cap = 64 * 2 ** 20            # conservative (v7x per-TC)
    return int(0.85 * cap)


def _vmem_limit(need_bytes):
    """Per-kernel scoped-VMEM request: 2x headroom, clamped to the budget."""
    return int(min(_vmem_budget(), max(2 * int(need_bytes), 16 * 2 ** 20)))


@functools.lru_cache(maxsize=1)
def _single_buffer_supported():
    """Compile-only probe: does pipeline_mode=pl.Buffered(1) lower here?
    Single-buffering grid-invariant (resident) weights halves their VMEM cost
    (matters on v7x's 64 MiB VMEM).  No device execution — lower + compile."""
    try:
        def _k(x_ref, w_ref, o_ref):
            o_ref[...] = x_ref[...] + w_ref[...]

        f = pl.pallas_call(
            _k,
            out_shape=jax.ShapeDtypeStruct((16, 128), jnp.float32),
            grid=(2,),
            in_specs=[
                pl.BlockSpec((8, 128), lambda i: (i, 0)),
                pl.BlockSpec((8, 128), lambda i: (0, 0),
                             pipeline_mode=pl.Buffered(1)),
            ],
            out_specs=pl.BlockSpec((8, 128), lambda i: (i, 0)),
        )
        jax.jit(f).lower(
            jax.ShapeDtypeStruct((16, 128), jnp.float32),
            jax.ShapeDtypeStruct((8, 128), jnp.float32),
        ).compile()
        return True
    except Exception:
        return False


def _resident_spec(block_shape):
    """BlockSpec for a grid-invariant operand (weights / biases / LN affine):
    constant index_map, single-buffered when supported."""
    ndim = len(block_shape)
    index_map = lambda i: (0,) * ndim
    if _single_buffer_supported():
        return pl.BlockSpec(block_shape, index_map,
                            pipeline_mode=pl.Buffered(1))
    return pl.BlockSpec(block_shape, index_map)


def _choose_tile_m(M, sublane, bytes_per_row, resident_bytes):
    """Sublane-aligned token tile bounded by the VMEM budget.

    Returns (tile_m, padded_M) with padded_M a multiple of tile_m (>= M) so a
    non-divisible M (e.g. ViT N=197) is handled by zero-padding instead of a
    single-step grid."""
    avail = max(_vmem_budget() - int(resident_bytes), 2 * 2 ** 20)
    cap = max(sublane, min(int(avail // max(int(bytes_per_row), 1)), 1024))
    cap = (cap // sublane) * sublane
    Mp = _round_up(M, sublane)
    # prefer >= 2 grid steps so BlockSpec pipelining overlaps DMA & compute
    # (and a parallel axis exists for v7x megacore sharding).
    search_cap = min(cap, max(sublane, Mp // 2)) if Mp > sublane else sublane
    best = None
    t = sublane
    while t <= search_cap:
        if Mp % t == 0:
            best = t
        t += sublane
    if best is None:
        best = min(cap, Mp)
        Mp = _round_up(M, best)
    return best, Mp


# ----------------------------------------------------------------------------
# Kernels
# ----------------------------------------------------------------------------

def _ln_matmul_kernel(x_ref, g_ref, b_ref, w_ref, o_ref, *, eps):
    """Fused LayerNorm -> x @ W (no bias): the QKV projection.
    LN statistics are computed in f32 from the un-cast activations."""
    x = x_ref[...].astype(jnp.float32)                           # (tm, C)
    mu = jnp.mean(x, axis=-1, keepdims=True)
    xc = x - mu
    var = jnp.mean(xc * xc, axis=-1, keepdims=True)
    xn = (xc * jax.lax.rsqrt(var + eps)) * g_ref[...] + b_ref[...]
    y = jnp.dot(xn.astype(w_ref.dtype), w_ref[...],
                preferred_element_type=jnp.float32)              # (tm, 3C)
    o_ref[...] = y.astype(o_ref.dtype)


def _attn_proj_kernel(qkv_ref, wp_ref, bp_ref, x_ref, o_ref, attn_ref, *,
                      num_heads, scale):
    """One batch element: multi-head attention + output projection + bias +
    residual.  Reads the lane-dense (N, 3C) qkv tile, splits heads with static
    lane slices, writes per-head outputs into a lane-dense (N, C) VMEM scratch
    and does a single (N,C)@(C,C) projection matmul; output store is C-wide.

    Softmax never divides the (N, N) matrix: o = exp(s) @ v scaled by the
    approximate reciprocal of the row sums (EUP slot)."""
    # TODO(synk): flash-style KV-tiled online softmax for long sequences
    # (the (N, N) f32 score tile per head limits N on v7x's 64 MiB VMEM).
    N = qkv_ref.shape[1]
    C = wp_ref.shape[0]
    hd = C // num_heads
    qkv = qkv_ref[0]                                             # (N, 3C)
    for h in range(num_heads):                                   # static unroll
        lo = h * hd
        qh = qkv[:, lo:lo + hd] * scale                          # scale folded into q
        kh = qkv[:, C + lo:C + lo + hd]
        vh = qkv[:, 2 * C + lo:2 * C + lo + hd]
        s = jax.lax.dot_general(qh, kh, (((1,), (1,)), ((), ())),
                                preferred_element_type=jnp.float32)  # (N, N)
        s = s - jnp.max(s, axis=-1, keepdims=True)
        e = jnp.exp(s)                                           # f32
        oh = jnp.dot(e.astype(vh.dtype), vh,
                     preferred_element_type=jnp.float32)         # (N, hd)
        oh = oh * pl.reciprocal(jnp.sum(e, axis=-1, keepdims=True),
                                approx=True)
        attn_ref[:, lo:lo + hd] = oh                             # head merge in VMEM
    y = jnp.dot(attn_ref[...].astype(wp_ref.dtype), wp_ref[...],
                preferred_element_type=jnp.float32)              # (N, C)
    y = y + bp_ref[...] + x_ref[0].astype(jnp.float32)           # + residual
    o_ref[0] = y.astype(o_ref.dtype)


def _ln_mlp_residual_kernel(x_ref, g_ref, bt_ref, w1_ref, b1_ref,
                            w2_ref, b2_ref, o_ref, *, eps):
    """Fused LayerNorm -> fc1 -> GELU(erf) -> fc2 -> +residual (MLP branch)."""
    # TODO(synk): add a K-grid axis over H with an f32 VMEM accumulator when
    # resident fc1/fc2 weights no longer fit v7x's 64 MiB VMEM.
    x = x_ref[...].astype(jnp.float32)                           # (tm, C) = feat1
    mu = jnp.mean(x, axis=-1, keepdims=True)
    xc = x - mu
    var = jnp.mean(xc * xc, axis=-1, keepdims=True)
    xn = (xc * jax.lax.rsqrt(var + eps)) * g_ref[...] + bt_ref[...]
    h = jnp.dot(xn.astype(w1_ref.dtype), w1_ref[...],
                preferred_element_type=jnp.float32) + b1_ref[...]
    h = jax.nn.gelu(h, approximate=False)                        # torch nn.GELU()
    y = jnp.dot(h.astype(w2_ref.dtype), w2_ref[...],
                preferred_element_type=jnp.float32) + b2_ref[...]
    o_ref[...] = (y + x).astype(o_ref.dtype)                     # residual w/ feat1


# ----------------------------------------------------------------------------
# pallas_call wrappers
# ----------------------------------------------------------------------------

def _ln_qkv(x2d, g, b, w, *, eps, tile_m):
    M, C = x2d.shape
    C3 = w.shape[1]
    assert M % tile_m == 0
    itm_x = x2d.dtype.itemsize
    itm_w = w.dtype.itemsize
    wbuf = 1 if _single_buffer_supported() else 2
    need = (2 * tile_m * C * itm_x + 2 * tile_m * C3 * itm_w
            + wbuf * C * C3 * itm_w + 2 * C * 4
            + tile_m * (C + C3) * 4)
    return pl.pallas_call(
        functools.partial(_ln_matmul_kernel, eps=eps),
        out_shape=jax.ShapeDtypeStruct((M, C3), w.dtype),
        grid=(M // tile_m,),
        in_specs=[
            pl.BlockSpec((tile_m, C), lambda i: (i, 0)),
            _resident_spec((1, C)),
            _resident_spec((1, C)),
            _resident_spec((C, C3)),
        ],
        out_specs=pl.BlockSpec((tile_m, C3), lambda i: (i, 0)),
        compiler_params=pltpu.CompilerParams(
            dimension_semantics=("parallel",),
            vmem_limit_bytes=_vmem_limit(need)),
        cost_estimate=pl.CostEstimate(
            flops=2 * M * C * C3 + 10 * M * C,
            transcendentals=M,
            bytes_accessed=M * C * itm_x + M * C3 * itm_w
                           + C * C3 * itm_w + 2 * C * 4),
    )(x2d, g, b, w)


def _attn_proj_residual(qkv3, wproj, bproj, x3d, *, num_heads, scale):
    B, N, C3 = qkv3.shape
    C = C3 // 3
    itm_q = qkv3.dtype.itemsize
    itm_x = x3d.dtype.itemsize
    itm_w = wproj.dtype.itemsize
    wbuf = 1 if _single_buffer_supported() else 2
    need = (2 * N * C3 * itm_q + 4 * N * C * itm_x          # in/out tiles, dbl-buf
            + wbuf * C * C * itm_w + C * 4                  # resident wproj/bproj
            + N * C * 4                                      # attn scratch (f32)
            + 3 * N * N * 4 + 4 * N * C)                     # per-head temporaries
    return pl.pallas_call(
        functools.partial(_attn_proj_kernel, num_heads=num_heads, scale=scale),
        out_shape=jax.ShapeDtypeStruct((B, N, C), x3d.dtype),
        grid=(B,),
        in_specs=[
            pl.BlockSpec((1, N, C3), lambda i: (i, 0, 0)),
            _resident_spec((C, C)),
            _resident_spec((1, C)),
            pl.BlockSpec((1, N, C), lambda i: (i, 0, 0)),
        ],
        out_specs=pl.BlockSpec((1, N, C), lambda i: (i, 0, 0)),
        scratch_shapes=[pltpu.VMEM((N, C), jnp.float32)],
        compiler_params=pltpu.CompilerParams(
            dimension_semantics=("parallel",),
            vmem_limit_bytes=_vmem_limit(need)),
        cost_estimate=pl.CostEstimate(
            flops=4 * B * N * N * C + 2 * B * N * C * C,
            transcendentals=B * num_heads * N * N,
            bytes_accessed=B * N * (C3 * itm_q + 2 * C * itm_x) + C * C * itm_w),
    )(qkv3, wproj, bproj, x3d)


def _ln_mlp_residual(feat1, g, b, w1, b1, w2, b2, *, eps, tile_m):
    M, C = feat1.shape
    H = w1.shape[1]
    assert M % tile_m == 0
    itm_x = feat1.dtype.itemsize
    itm_w = w1.dtype.itemsize
    wbuf = 1 if _single_buffer_supported() else 2
    need = (4 * tile_m * C * itm_x                           # in/out tiles, dbl-buf
            + wbuf * 2 * C * H * itm_w + (H + 3 * C) * 4     # resident weights/biases
            + tile_m * (H + 2 * C) * 4)                      # f32 intermediates
    return pl.pallas_call(
        functools.partial(_ln_mlp_residual_kernel, eps=eps),
        out_shape=jax.ShapeDtypeStruct((M, C), feat1.dtype),
        grid=(M // tile_m,),
        in_specs=[
            pl.BlockSpec((tile_m, C), lambda i: (i, 0)),
            _resident_spec((1, C)),
            _resident_spec((1, C)),
            _resident_spec((C, H)),
            _resident_spec((1, H)),
            _resident_spec((H, C)),
            _resident_spec((1, C)),
        ],
        out_specs=pl.BlockSpec((tile_m, C), lambda i: (i, 0)),
        compiler_params=pltpu.CompilerParams(
            dimension_semantics=("parallel",),
            vmem_limit_bytes=_vmem_limit(need)),
        cost_estimate=pl.CostEstimate(
            flops=4 * M * C * H + 12 * M * C,
            transcendentals=M * H + M,
            bytes_accessed=2 * M * C * itm_x + 2 * C * H * itm_w
                           + (H + 3 * C) * 4),
    )(feat1, g, b, w1, b1, w2, b2)


# ----------------------------------------------------------------------------
# encoder_block forward: norm1 -> attention(+proj+residual) -> norm2 -> MLP -> +
# ----------------------------------------------------------------------------

def encoder_block_forward(x, params, *, num_heads=12, eps=1e-5,
                          compute_dtype=jnp.bfloat16):
    """x: (B, N, C). Dropout layers are identity (inference / eval mode).
    compute_dtype (default bf16) is used for weights and matmul operands;
    LayerNorm statistics, residuals, softmax and GELU stay in f32 and the
    activations entering LayerNorm are never pre-cast."""
    # TODO(synk): dropout with p>0 (training mode) not implemented.
    # TODO(synk): verify the single "parallel" grid axis shards across both
    # v7x TensorCores; otherwise add an explicit core-parallel leading axis.
    B, N, C = x.shape
    assert C % num_heads == 0
    hd = C // num_heads
    cdt = jnp.dtype(compute_dtype) if compute_dtype is not None else jnp.dtype(x.dtype)
    f32 = jnp.float32
    M = B * N
    H = params["w1"].shape[1]

    g1 = params["ln1_g"].astype(f32).reshape(1, C)
    b1 = params["ln1_b"].astype(f32).reshape(1, C)
    g2 = params["ln2_g"].astype(f32).reshape(1, C)
    b2 = params["ln2_b"].astype(f32).reshape(1, C)
    wqkv = params["wqkv"].astype(cdt)
    wproj = params["wproj"].astype(cdt)
    bproj = params["bproj"].astype(f32).reshape(1, C)
    w1 = params["w1"].astype(cdt)
    bm1 = params["b1"].astype(f32).reshape(1, H)
    w2 = params["w2"].astype(cdt)
    bm2 = params["b2"].astype(f32).reshape(1, C)

    itm_x = jnp.dtype(x.dtype).itemsize
    itm_c = cdt.itemsize
    wbuf = 1 if _single_buffer_supported() else 2
    sublane = 16 if min(itm_x, itm_c) < 4 else 8
    # VMEM-per-row / resident-weight footprints of the two token-tiled kernels.
    row_qkv = 2 * C * itm_x + 2 * 3 * C * itm_c + 4 * 4 * C
    res_qkv = wbuf * 3 * C * C * itm_c + 2 * C * 4
    row_mlp = 4 * C * itm_x + 4 * (2 * C + H)
    res_mlp = wbuf * 2 * C * H * itm_c + (H + 3 * C) * 4
    tile_m, Mp = _choose_tile_m(M, sublane,
                                max(row_qkv, row_mlp), max(res_qkv, res_mlp))

    x2d = x.reshape(M, C)
    x2d_p = jnp.pad(x2d, ((0, Mp - M), (0, 0))) if Mp != M else x2d

    # norm1 + qkv projection (qkv_bias=False)
    qkv = _ln_qkv(x2d_p, g1, b1, wqkv, eps=eps, tile_m=tile_m)       # (Mp, 3C)
    qkv3 = (qkv[:M] if Mp != M else qkv).reshape(B, N, 3 * C)

    # attention + output projection + bias + residual with x (fused, per batch)
    feat1_3d = _attn_proj_residual(qkv3, wproj, bproj, x,
                                   num_heads=num_heads,
                                   scale=hd ** -0.5)                 # (B, N, C)

    # norm2 + MLP + residual with feat1
    feat1 = feat1_3d.reshape(M, C)
    feat1_p = jnp.pad(feat1, ((0, Mp - M), (0, 0))) if Mp != M else feat1
    feat2 = _ln_mlp_residual(feat1_p, g2, b2, w1, bm1, w2, bm2,
                             eps=eps, tile_m=tile_m)                 # (Mp, C)
    feat2 = feat2[:M] if Mp != M else feat2
    return feat2.reshape(B, N, C)


# ----------------------------------------------------------------------------
# Parameter init & pure-JAX reference
# ----------------------------------------------------------------------------

def init_linear(key, fan_in, fan_out, dtype=jnp.float32):
    """nn.Linear default init (uniform +-1/sqrt(fan_in)), stored as (in, out)."""
    kw, kb = jax.random.split(key)
    bound = 1.0 / math.sqrt(fan_in)
    w = jax.random.uniform(kw, (fan_in, fan_out), dtype, -bound, bound)
    b = jax.random.uniform(kb, (fan_out,), dtype, -bound, bound)
    return w, b


def reference_encoder_block(x, p, *, num_heads=12, eps=1e-5):
    """Pure-JAX f32 reference with the same math as the PyTorch module."""
    B, N, C = x.shape
    nh, hd = num_heads, C // num_heads

    def ln(z, g, b):
        mu = z.mean(-1, keepdims=True)
        var = ((z - mu) ** 2).mean(-1, keepdims=True)
        return (z - mu) / jnp.sqrt(var + eps) * g + b

    h = ln(x, p["ln1_g"], p["ln1_b"])
    qkv = h @ p["wqkv"]
    qkv = qkv.reshape(B, N, 3, nh, hd).transpose(2, 0, 3, 1, 4)
    q, k, v = qkv[0], qkv[1], qkv[2]
    s = jnp.einsum("bhqd,bhkd->bhqk", q, k) * (hd ** -0.5)
    s = s - s.max(-1, keepdims=True)
    w = jnp.exp(s)
    w = w / w.sum(-1, keepdims=True)
    o = jnp.einsum("bhqk,bhkd->bhqd", w, v)
    o = o.transpose(0, 2, 1, 3).reshape(B, N, C)
    feat1 = o @ p["wproj"] + p["bproj"] + x
    h2 = ln(feat1, p["ln2_g"], p["ln2_b"])
    mlp = jax.nn.gelu(h2 @ p["w1"] + p["b1"], approximate=False) @ p["w2"] + p["b2"]
    return mlp + feat1


if __name__ == "__main__":
    # Small shapes consistent with encoder_block: dim divisible by 12 heads.
    batch, seq, dim, num_heads = 2, 16, 96, 12
    hidden = int(dim * 4.0)                       # mlp_ratio = 4.0

    key = jax.random.PRNGKey(0)
    ks = jax.random.split(key, 10)
    x = jax.random.normal(ks[0], (batch, seq, dim), jnp.float32)

    params = {
        "ln1_g": 1.0 + 0.1 * jax.random.normal(ks[1], (dim,), jnp.float32),
        "ln1_b": 0.1 * jax.random.normal(ks[2], (dim,), jnp.float32),
        "ln2_g": 1.0 + 0.1 * jax.random.normal(ks[3], (dim,), jnp.float32),
        "ln2_b": 0.1 * jax.random.normal(ks[4], (dim,), jnp.float32),
    }
    params["wqkv"], _ = init_linear(ks[5], dim, 3 * dim)   # qkv_bias=False
    params["wproj"], params["bproj"] = init_linear(ks[6], dim, dim)
    params["w1"], params["b1"] = init_linear(ks[7], dim, hidden)
    params["w2"], params["b2"] = init_linear(ks[8], hidden, dim)

    ref = reference_encoder_block(x, params, num_heads=num_heads)

    # Full-f32 path: tight check against the pure-JAX reference.
    out = encoder_block_forward(x, params, num_heads=num_heads,
                                compute_dtype=jnp.float32)
    jax.block_until_ready(out)
    assert out.shape == ref.shape
    err = float(jnp.max(jnp.abs(out - ref)))
    assert jnp.allclose(out, ref, atol=2e-2, rtol=2e-2), \
        f"f32 mismatch vs reference, max abs err {err}"

    # Default path: bf16 matmul operands / weights, f32 accumulation — loose check.
    out_bf16 = encoder_block_forward(x, params, num_heads=num_heads)
    jax.block_until_ready(out_bf16)
    err_bf16 = float(jnp.max(jnp.abs(out_bf16.astype(jnp.float32) - ref)))
    assert err_bf16 < 0.25, f"bf16 mismatch vs reference, max abs err {err_bf16}"

    print("KERNEL_OK")
</pallas_src>

<mosaic_0001>
module attributes {stable_mosaic.version = 11 : i64} {
  func.func @_ln_matmul_kernel(%arg0: i32, %arg1: memref<16x96xf32, #tpu.memory_space<vmem>>, %arg2: memref<1x96xf32, #tpu.memory_space<vmem>>, %arg3: memref<1x96xf32, #tpu.memory_space<vmem>>, %arg4: memref<96x288xf32, #tpu.memory_space<vmem>>, %arg5: memref<16x288xf32, #tpu.memory_space<vmem>>) attributes {dimension_semantics = [#tpu.dimension_semantics<parallel>], iteration_bounds = array<i64: 2>, scalar_prefetch = 0 : i64, scratch_operands = 0 : i64, tpu.core_type = #tpu.core_type<tc>, window_params = [{transform_indices = @transform_0, window_bounds = array<i64: 16, 96>}, {pipeline_mode = #tpu.pipeline_mode<synchronous>, transform_indices = @transform_1, window_bounds = array<i64: 1, 96>}, {pipeline_mode = #tpu.pipeline_mode<synchronous>, transform_indices = @transform_2, window_bounds = array<i64: 1, 96>}, {pipeline_mode = #tpu.pipeline_mode<synchronous>, transform_indices = @transform_3, window_bounds = array<i64: 96, 288>}, {transform_indices = @transform_4, window_bounds = array<i64: 16, 288>}]} {
    %c0 = arith.constant 0 : index
    %c0_0 = arith.constant 0 : index
    %0 = vector.load %arg1[%c0, %c0_0] : memref<16x96xf32, #tpu.memory_space<vmem>>, vector<16x96xf32>
    %cst = arith.constant dense<0.000000e+00> : vector<16xf32>
    %1 = vector.multi_reduction <add>, %0, %cst [1] : vector<16x96xf32> to vector<16xf32>
    %2 = vector.shape_cast %1 : vector<16xf32> to vector<16x1xf32>
    %cst_1 = arith.constant 9.600000e+01 : f32
    %3 = vector.broadcast %cst_1 : f32 to vector<16x1xf32>
    %4 = arith.divf %2, %3 : vector<16x1xf32>
    %5 = vector.broadcast %4 : vector<16x1xf32> to vector<16x96xf32>
    %6 = arith.subf %0, %5 : vector<16x96xf32>
    %7 = arith.mulf %6, %6 : vector<16x96xf32>
    %cst_2 = arith.constant dense<0.000000e+00> : vector<16xf32>
    %8 = vector.multi_reduction <add>, %7, %cst_2 [1] : vector<16x96xf32> to vector<16xf32>
    %9 = vector.shape_cast %8 : vector<16xf32> to vector<16x1xf32>
    %cst_3 = arith.constant 9.600000e+01 : f32
    %10 = vector.broadcast %cst_3 : f32 to vector<16x1xf32>
    %11 = arith.divf %9, %10 : vector<16x1xf32>
    %cst_4 = arith.constant 9.99999974E-6 : f32
    %12 = vector.broadcast %cst_4 : f32 to vector<16x1xf32>
    %13 = arith.addf %11, %12 : vector<16x1xf32>
    %14 = math.rsqrt %13 : vector<16x1xf32>
    %15 = vector.broadcast %14 : vector<16x1xf32> to vector<16x96xf32>
    %16 = arith.mulf %6, %15 : vector<16x96xf32>
    %c0_5 = arith.constant 0 : index
    %c0_6 = arith.constant 0 : index
    %17 = vector.load %arg2[%c0_5, %c0_6] : memref<1x96xf32, #tpu.memory_space<vmem>>, vector<1x96xf32>
    %18 = vector.broadcast %17 : vector<1x96xf32> to vector<16x96xf32>
    %19 = arith.mulf %16, %18 : vector<16x96xf32>
    %c0_7 = arith.constant 0 : index
    %c0_8 = arith.constant 0 : index
    %20 = vector.load %arg3[%c0_7, %c0_8] : memref<1x96xf32, #tpu.memory_space<vmem>>, vector<1x96xf32>
    %21 = vector.broadcast %20 : vector<1x96xf32> to vector<16x96xf32>
    %22 = arith.addf %19, %21 : vector<16x96xf32>
    %c0_9 = arith.constant 0 : index
    %c0_10 = arith.constant 0 : index
    %23 = vector.load %arg4[%c0_9, %c0_10] : memref<96x288xf32, #tpu.memory_space<vmem>>, vector<96x288xf32>
    %cst_11 = arith.constant dense<0.000000e+00> : vector<16x288xf32>
    %24 = tpu.matmul %22, %23, %cst_11 {dimension_numbers = #tpu.dot_dimension_numbers<[1], [0], [0], [1], [0, 0, 1, 1], [], []>} : vector<16x96xf32>, vector<96x288xf32>, vector<16x288xf32> -> vector<16x288xf32>
    %c0_12 = arith.constant 0 : index
    %c0_13 = arith.constant 0 : index
    %25 = vector.load %arg5[%c0_12, %c0_13] : memref<16x288xf32, #tpu.memory_space<vmem>>, vector<16x288xf32>
    tpu.vector_store %arg5[%c0_12, %c0_13], %24 {strides = array<i32>} : memref<16x288xf32, #tpu.memory_space<vmem>>, vector<16x288xf32>,
    return
  }
  func.func @transform_0(%arg0: i32) -> (i32, i32) {
    %c0_i32 = arith.constant 0 : i32
    %c0_i32_0 = arith.constant 0 : i32
    return %arg0, %c0_i32 : i32, i32
  }
  func.func @transform_1(%arg0: i32) -> (i32, i32) {
    %c0_i32 = arith.constant 0 : i32
    %c0_i32_0 = arith.constant 0 : i32
    %c0_i32_1 = arith.constant 0 : i32
    return %c0_i32, %c0_i32_0 : i32, i32
  }
  func.func @transform_2(%arg0: i32) -> (i32, i32) {
    %c0_i32 = arith.constant 0 : i32
    %c0_i32_0 = arith.constant 0 : i32
    %c0_i32_1 = arith.constant 0 : i32
    return %c0_i32, %c0_i32_0 : i32, i32
  }
  func.func @transform_3(%arg0: i32) -> (i32, i32) {
    %c0_i32 = arith.constant 0 : i32
    %c0_i32_0 = arith.constant 0 : i32
    %c0_i32_1 = arith.constant 0 : i32
    return %c0_i32, %c0_i32_0 : i32, i32
  }
  func.func @transform_4(%arg0: i32) -> (i32, i32) {
    %c0_i32 = arith.constant 0 : i32
    %c0_i32_0 = arith.constant 0 : i32
    return %arg0, %c0_i32 : i32, i32
  }
}

</mosaic_0001>

<llo_original>
// kernel: tpu_custom_call.1
$region0: #{tpu_custom_call.1}
  #allocation0 [shape = 'u32[]', space=smem, size = 0x4, offset = 0x4, fixed_abs, tag = 'smem constant byte address 0x4 - core index']
  #allocation1 [shape = 'u32[144,128]{1,0:T(1,128)}', space=vmem, size = 0x12000, scoped, tag = 'internal scratch']
  %s0 = inlined_call_operand.hbm [shape: f32[32,96], index: 0, kind: input, shape index: {}]
  %s1 = inlined_call_operand.vmem [shape: f32[1,96], index: 1, kind: input, shape index: {}]
  %s2 = inlined_call_operand.vmem [shape: f32[1,96], index: 2, kind: input, shape index: {}]
  %s3 = inlined_call_operand.hbm [shape: f32[96,288], index: 3, kind: input, shape index: {}]
  %s4 = inlined_call_operand.hbm [shape: f32[32,288], index: 4, kind: output, shape index: {}]
  %s5 = sld [smem:[#allocation0]]
  $region57: #{tpu_custom_call.1} parent=0
    _
  %s7 = ssub.s32 1, %s5
  %s8 = scalar_select 0, %s7, %s5
  $region1: #{tpu_custom_call.1} parent=0
    #allocation2 [shape = 'u8[16384]{0}', space=vmem, size = 0x4000, scoped, tag = 'input window, operand 0']
    #allocation3 [shape = 's32[2]{0}', space=sflag, size = 0x8, scoped, tag = 'scoped memory for tpu_custom_call.1']
    #allocation4 [shape = 's32[2]{0}', space=sflag, size = 0x8, scoped, tag = 'scoped memory for tpu_custom_call.1']
    #allocation5 [shape = 'u8[147456]{0}', space=vmem, size = 0x24000, scoped, tag = 'input window, operand 3, single buffered']
    #allocation6 [shape = 's32[1]{0}', space=sflag, size = 0x4, scoped, tag = 'scoped memory for tpu_custom_call.1']
    #allocation7 [shape = 'u8[49152]{0}', space=vmem, size = 0xc000, scoped, tag = 'output window, operand 0']
    %9 = vsyncpa [#allocation3], 0
    %s10 = scalar_lea.sflag [#allocation3], 1
    %11 = vsyncpa %s10, 0
    %12 = vsyncpa [#allocation6], 0
    %13 = vsyncpa [#allocation4], 0
    %s14 = scalar_lea.sflag [#allocation4], 1
    %15 = vsyncpa %s14, 0
    loop: start=0, step=1, limit=4
    $region2: #{tpu_custom_call.1} parent=1 // loop_pre_header
      _
    $region3: #{tpu_custom_call.1} parent=1 // loop_header
      %s17 = sphi 0, %s21
      %p18 = scmp.ge.s32.totalorder %s17, 4
      %s27 = sphi 0, %s29
      %s30 = sphi 0, %s27
      %s31 = sphi 0, %s30
      %s47 = sphi 0, %s31
      %s51 = sphi 0, %s51
      %s53 = sphi 0, %s51
      %s54 = sphi 0, %s53
      %s68 = sphi 0, %s54
      %s72 = sphi 0, %s72
      %s74 = sphi 0, %s72
      %s75 = sphi 0, %s74
      %s89 = sphi 0, %s75
      %s93 = sphi 0, %s93
      %s95 = sphi 0, %s93
      %s96 = sphi 0, %s95
      %s110 = sphi 0, %s96
      %s116 = sphi 0, %s118
      %s119 = sphi 0, %s116
      %s120 = sphi 0, %s119
      %s136 = sphi 0, %s120
    $region4: #{tpu_custom_call.1} parent=1 // loop_header_branch
      %20 = sbr.rel (%p18) target = $region8
    $region5: #{tpu_custom_call.1} parent=1 // loop_body
      %s22 = ssub.s32 %s17, 1
      %s23 = ssub.s32 %s17, 2
      %s24 = sadd.s32 %s17, 1
      %s25 = ssub.s32 %s17, %s24
      %p26 = scmp.eq.s32.totalorder %s25, 0
      %s28 = sadd.s32 %s27, 1
      %s29 = scalar_select %p26, %s27, %s28
      %p32 = pneg %p26
      %p33 = scmp.eq.s32.totalorder %s17, 1
      %p34 = por %p32, %p33
      %p35 = scmp.ne.s32.totalorder %s27, %s30
      %p36 = scmp.eq.s32.totalorder %s17, 0
      %p37 = por %p35, %p36
      %p38 = scmp.ne.s32.totalorder %s27, %s30
      %p39 = scmp.eq.s32.totalorder %s22, 1
      %p40 = por %p38, %p39
      %p41 = scmp.ne.s32.totalorder %s30, %s31
      %p42 = scmp.eq.s32.totalorder %s22, 0
      %p43 = por %p41, %p42
      %p44 = scmp.ne.s32.totalorder %s30, %s31
      %p45 = scmp.eq.s32.totalorder %s23, 1
      %p46 = por %p44, %p45
      %p48 = scmp.ne.s32.totalorder %s31, %s47
      %p49 = scmp.eq.s32.totalorder %s23, 0
      %p50 = por %p48, %p49
      %s52 = sadd.s32 %s51, 1
      %p55 = scmp.eq.s32.totalorder %s17, 1
      %p56 = scmp.ne.s32.totalorder %s51, %s53
      %p57 = scmp.eq.s32.totalorder %s17, 0
      %p58 = por %p56, %p57
      %p59 = scmp.ne.s32.totalorder %s51, %s53
      %p60 = scmp.eq.s32.totalorder %s22, 1
      %p61 = por %p59, %p60
      %p62 = scmp.ne.s32.totalorder %s53, %s54
      %p63 = scmp.eq.s32.totalorder %s22, 0
      %p64 = por %p62, %p63
      %p65 = scmp.ne.s32.totalorder %s53, %s54
      %p66 = scmp.eq.s32.totalorder %s23, 1
      %p67 = por %p65, %p66
      %p69 = scmp.ne.s32.totalorder %s54, %s68
      %p70 = scmp.eq.s32.totalorder %s23, 0
      %p71 = por %p69, %p70
      %s73 = sadd.s32 %s72, 1
      %p76 = scmp.eq.s32.totalorder %s17, 1
      %p77 = scmp.ne.s32.totalorder %s72, %s74
      %p78 = scmp.eq.s32.totalorder %s17, 0
      %p79 = por %p77, %p78
      %p80 = scmp.ne.s32.totalorder %s72, %s74
      %p81 = scmp.eq.s32.totalorder %s22, 1
      %p82 = por %p80, %p81
      %p83 = scmp.ne.s32.totalorder %s74, %s75
      %p84 = scmp.eq.s32.totalorder %s22, 0
      %p85 = por %p83, %p84
      %p86 = scmp.ne.s32.totalorder %s74, %s75
      %p87 = scmp.eq.s32.totalorder %s23, 1
      %p88 = por %p86, %p87
      %p90 = scmp.ne.s32.totalorder %s75, %s89
      %p91 = scmp.eq.s32.totalorder %s23, 0
      %p92 = por %p90, %p91
      %s94 = sadd.s32 %s93, 1
      %p97 = scmp.eq.s32.totalorder %s17, 1
      %p98 = scmp.ne.s32.totalorder %s93, %s95
      %p99 = scmp.eq.s32.totalorder %s17, 0
      %p100 = por %p98, %p99
      %p101 = scmp.ne.s32.totalorder %s93, %s95
      %p102 = scmp.eq.s32.totalorder %s22, 1
      %p103 = por %p101, %p102
      %p104 = scmp.ne.s32.totalorder %s95, %s96
      %p105 = scmp.eq.s32.totalorder %s22, 0
      %p106 = por %p104, %p105
      %p107 = scmp.ne.s32.totalorder %s95, %s96
      %p108 = scmp.eq.s32.totalorder %s23, 1
      %p109 = por %p107, %p108
      %p111 = scmp.ne.s32.totalorder %s96, %s110
      %p112 = scmp.eq.s32.totalorder %s23, 0
      %p113 = por %p111, %p112
      %s114 = ssub.s32 %s17, %s24
      %p115 = scmp.eq.s32.totalorder %s114, 0
      %s117 = sadd.s32 %s116, 1
      %s118 = scalar_select %p115, %s116, %s117
      %p121 = pneg %p115
      %p122 = scmp.eq.s32.totalorder %s17, 1
      %p123 = por %p121, %p122
      %p124 = scmp.ne.s32.totalorder %s116, %s119
      %p125 = scmp.eq.s32.totalorder %s17, 0
      %p126 = por %p124, %p125
      %p127 = scmp.ne.s32.totalorder %s116, %s119
      %p128 = scmp.eq.s32.totalorder %s22, 1
      %p129 = por %p127, %p128
      %p130 = scmp.ne.s32.totalorder %s119, %s120
      %p131 = scmp.eq.s32.totalorder %s22, 0
      %p132 = por %p130, %p131
      %p133 = scmp.ne.s32.totalorder %s119, %s120
      %p134 = scmp.eq.s32.totalorder %s23, 1
      %p135 = por %p133, %p134
      %p137 = scmp.ne.s32.totalorder %s120, %s136
      %p138 = scmp.eq.s32.totalorder %s23, 0
      %p139 = por %p137, %p138
      %p140 = scmp.le.s32.totalorder 1, %s17
      %p141 = scmp.lt.s32.totalorder %s17, 3
      %p142 = pnand %p140, %p141
      %p143 = pneg %p142
      // Predicated region
      $region9: #{tpu_custom_call.1} parent=5 // pred_check
        _
      $region10: #{tpu_custom_call.1} parent=5 // pred_check_branch
        %145 = sbr.rel (%p142) target = $region12
      $region11: #{tpu_custom_call.1} parent=5 // pred_region
        %s146 = ssub.s32 %s17, 1
        // Predicated region
        $region13: #{tpu_custom_call.1} parent=11 // pred_check
          %p147 = pneg %p64
        $region14: #{tpu_custom_call.1} parent=11 // pred_check_branch
          %149 = sbr.rel (%p147) target = $region16
        $region15: #{tpu_custom_call.1} parent=11 // pred_region
          _
        $region16: #{tpu_custom_call.1} parent=11 // pred_fallthru
          _
        // Predicated region
        $region17: #{tpu_custom_call.1} parent=11 // pred_check
          %p150 = pneg %p85
        $region18: #{tpu_custom_call.1} parent=11 // pred_check_branch
          %152 = sbr.rel (%p150) target = $region20
        $region19: #{tpu_custom_call.1} parent=11 // pred_region
          _
        $region20: #{tpu_custom_call.1} parent=11 // pred_fallthru
          _
        // Predicated region
        $region21: #{tpu_custom_call.1} parent=11 // pred_check
          %p153 = pneg %p106
        $region22: #{tpu_custom_call.1} parent=11 // pred_check_branch
          %155 = sbr.rel (%p153) target = $region24
        $region23: #{tpu_custom_call.1} parent=11 // pred_region
          %s157 = ssub.s32 4608, 4608
          %158 = vsyncadd [#allocation6], %s157
          %s159 = sshll.u32 [#allocation5], 4
          %s160 = int_to_ptr.vmem [resolvable:$true] %s159
          %165 = dma.hbm_to_vmem [thread:$0]  %s3, 4608, %s160, [#allocation6], 384, 384, 24
        $region24: #{tpu_custom_call.1} parent=11 // pred_fallthru
          _
      $region12: #{tpu_custom_call.1} parent=5 // pred_fallthru
        _
      %p166 = scmp.lt.s32.totalorder %s17, 2
      // Predicated region
      $region25: #{tpu_custom_call.1} parent=5 // pred_check
        %p167 = pneg %p166
      $region26: #{tpu_custom_call.1} parent=5 // pred_check_branch
        %169 = sbr.rel (%p167) target = $region28
      $region27: #{tpu_custom_call.1} parent=5 // pred_region
        // Predicated region
        $region29: #{tpu_custom_call.1} parent=27 // pred_check
          %p170 = pneg %p37
        $region30: #{tpu_custom_call.1} parent=27 // pred_check_branch
          %172 = sbr.rel (%p170) target = $region32
        $region31: #{tpu_custom_call.1} parent=27 // pred_region
          %s173 = sand.u32 %s27, 1
          %s174 = scalar_lea.sflag [#allocation3], %s173
          %s175 = sand.u32 %s27, 1
          %s176 = smul.addr %s175, 16
          %s177 = scalar_lea.vmem [#allocation2], %s176
          %s178 = smul.u32 2, %s17
          %s180 = ssub.s32 256, 256
          %181 = vsyncadd %s174, %s180
          %s182 = smul.addr %s178, 128
          %s183 = scalar_lea.hbm %s0, %s182
          %s184 = sshll.u32 %s177, 4
          %s185 = int_to_ptr.vmem [resolvable:$true] %s184
          %190 = dma.hbm_to_vmem [thread:$0]  %s183, 256, %s185, %s174, 128, 128, 8
        $region32: #{tpu_custom_call.1} parent=27 // pred_fallthru
          _
      $region28: #{tpu_custom_call.1} parent=5 // pred_fallthru
        _
      %p191 = scmp.le.s32.totalorder 1, %s17
      %p192 = scmp.lt.s32.totalorder %s17, 3
      %p193 = pnand %p191, %p192
      %p194 = pneg %p193
      // Predicated region
      $region33: #{tpu_custom_call.1} parent=5 // pred_check
        _
      $region34: #{tpu_custom_call.1} parent=5 // pred_check_branch
        %196 = sbr.rel (%p193) target = $region36
      $region35: #{tpu_custom_call.1} parent=5 // pred_region
        %s197 = ssub.s32 %s17, 1
        %s198 = sand.u32 %s30, 1
        %s199 = scalar_lea.sflag [#allocation3], %s198
        %s200 = sand.u32 %s30, 1
        %s201 = smul.addr %s200, 16
        %s202 = scalar_lea.vmem [#allocation2], %s201
        // Predicated region
        $region37: #{tpu_custom_call.1} parent=35 // pred_check
          %p203 = pneg %p43
        $region38: #{tpu_custom_call.1} parent=35 // pred_check_branch
          %205 = sbr.rel (%p203) target = $region40
        $region39: #{tpu_custom_call.1} parent=35 // pred_region
          %206 = dma.done %s199, 256
        $region40: #{tpu_custom_call.1} parent=35 // pred_fallthru
          _
        // Predicated region
        $region41: #{tpu_custom_call.1} parent=35 // pred_check
          %p207 = pneg %p106
        $region42: #{tpu_custom_call.1} parent=35 // pred_check_branch
          %209 = sbr.rel (%p207) target = $region44
        $region43: #{tpu_custom_call.1} parent=35 // pred_region
          %210 = dma.done [#allocation6], 4608
        $region44: #{tpu_custom_call.1} parent=35 // pred_fallthru
          _
        %s211 = sand.u32 %s30, 1
        %s212 = scalar_lea.sflag [#allocation3], %s211
        %s213 = sand.u32 %s30, 1
        %s214 = smul.addr %s213, 16
        %s215 = scalar_lea.vmem [#allocation2], %s214
        %p216 = pneg %p43
        %p217 = pneg %p40
        %p218 = pneg %p64
        %p219 = pneg %p61
        %p220 = pneg %p85
        %p221 = pneg %p82
        %p222 = pneg %p106
        %p223 = pneg %p103
        %p224 = pneg %p132
        %p225 = pneg %p129
        %s226 = sand.u32 %s119, 1
        %s227 = scalar_lea.sflag [#allocation4], %s226
        %s228 = sand.u32 %s119, 1
        %s229 = smul.addr %s228, 48
        %s230 = scalar_lea.vmem [#allocation7], %s229
        %s231 = smul.u32 2, %s22
        %s232 = smul.u32 2, %s22
        %v233 = vld [vmem:[%s202] sm:$0xff]
        %v234 = vld [vmem:[%s202 + $0x8] sm:$0xff]
        %vm235 = vcmask 785408
        %v236 = vsel %vm235, %v233, 0.0
        %237 = vadd.xlane.f32.xlu0 %v236
        %v238 = vpop.xlane.xlu0 %237
        %v239 = vsel %vm235, %v234, 0.0
        %240 = vadd.xlane.f32.xlu0 %v239
        %v241 = vpop.xlane.xlu0 %240
        %v242 = vrcp.pop 96.0
        %v243 = vmul.f32 %v238, %v242
        %v244 = vmul.f32 %v241, %v242
        %v245 = vsub.f32 %v233, %v243
        %v246 = vsub.f32 %v234, %v244
        %v247 = vmul.f32 %v245, %v245
        %v248 = vmul.f32 %v246, %v246
        %v249 = vsel %vm235, %v247, 0.0
        %250 = vadd.xlane.f32.xlu0 %v249
        %v251 = vpop.xlane.xlu0 %250
        %v252 = vsel %vm235, %v248, 0.0
        %253 = vadd.xlane.f32.xlu0 %v252
        %v254 = vpop.xlane.xlu0 %253
        %v255 = vmul.f32 %v251, %v242
        %v256 = vmul.f32 %v254, %v242
        %v257 = vadd.f32 %v255, 1e-05
        %v258 = vadd.f32 %v256, 1e-05
        %v259 = vrsqrt.pop %v257
        %v260 = vrsqrt.pop %v258
        %v261 = vmul.f32 %v245, %v259
        %v262 = vmul.f32 %v246, %v260
        %v263 = vld [vmem:[%s1] sm:$0x1]
        %v265 = vlaneseq
        %v266 = vshrl.u32 %v265, 7
        %v267 = vsub.s32 0, %v266
        %v268 = vrot.slane %v263, %v267
        %v270 = vmul.f32 %v261, %v268
        %v271 = vmul.f32 %v262, %v268
        %v272 = vld [vmem:[%s2] sm:$0x1]
        %v274 = vlaneseq
        %v275 = vshrl.u32 %v274, 7
        %v276 = vsub.s32 0, %v275
        %v277 = vrot.slane %v272, %v276
        %v279 = vadd.f32 %v270, %v277
        %v280 = vadd.f32 %v271, %v277
        %v281 = vld [vmem:[#allocation5] sm:$0xff]
        %v282 = vld [vmem:[#allocation5 + $0x8] sm:$0xff]
        %v283 = vld [vmem:[#allocation5 + $0x10] sm:$0xff]
        %v284 = vld [vmem:[#allocation5 + $0x18] sm:$0xff]
        %v285 = vld [vmem:[#allocation5 + $0x20] sm:$0xff]
        %v286 = vld [vmem:[#allocation5 + $0x28] sm:$0xff]
        %v287 = vld [vmem:[#allocation5 + $0x30] sm:$0xff]
        %v288 = vld [vmem:[#allocation5 + $0x38] sm:$0xff]
        %v289 = vld [vmem:[#allocation5 + $0x40] sm:$0xff]
        %v290 = vld [vmem:[#allocation5 + $0x48] sm:$0xff]
        %v291 = vld [vmem:[#allocation5 + $0x50] sm:$0xff]
        %v292 = vld [vmem:[#allocation5 + $0x58] sm:$0xff]
        %v293 = vld [vmem:[#allocation5 + $0x60] sm:$0xff]
        %v294 = vld [vmem:[#allocation5 + $0x68] sm:$0xff]
        %v295 = vld [vmem:[#allocation5 + $0x70] sm:$0xff]
        %v296 = vld [vmem:[#allocation5 + $0x78] sm:$0xff]
        %v297 = vld [vmem:[#allocation5 + $0x80] sm:$0xff]
        %v298 = vld [vmem:[#allocation5 + $0x88] sm:$0xff]
        %v299 = vld [vmem:[#allocation5 + $0x90] sm:$0xff]
        %v300 = vld [vmem:[#allocation5 + $0x98] sm:$0xff]
        %v301 = vld [vmem:[#allocation5 + $0xa0] sm:$0xff]
        %v302 = vld [vmem:[#allocation5 + $0xa8] sm:$0xff]
        %v303 = vld [vmem:[#allocation5 + $0xb0] sm:$0xff]
        %v304 = vld [vmem:[#allocation5 + $0xb8] sm:$0xff]
        %v305 = vld [vmem:[#allocation5 + $0xc0] sm:$0xff]
        %v306 = vld [vmem:[#allocation5 + $0xc8] sm:$0xff]
        %v307 = vld [vmem:[#allocation5 + $0xd0] sm:$0xff]
        %v308 = vld [vmem:[#allocation5 + $0xd8] sm:$0xff]
        %v309 = vld [vmem:[#allocation5 + $0xe0] sm:$0xff]
        %v310 = vld [vmem:[#allocation5 + $0xe8] sm:$0xff]
        %v311 = vld [vmem:[#allocation5 + $0xf0] sm:$0xff]
        %v312 = vld [vmem:[#allocation5 + $0xf8] sm:$0xff]
        %v313 = vld [vmem:[#allocation5 + $0x100] sm:$0xff]
        %v314 = vld [vmem:[#allocation5 + $0x108] sm:$0xff]
        %v315 = vld [vmem:[#allocation5 + $0x110] sm:$0xff]
        %v316 = vld [vmem:[#allocation5 + $0x118] sm:$0xff]
        %v318 = vsel %vm235, %v279, 0
        %v321 = vsel %vm235, %v280, 0
        %323 = vmatprep.subr.mxu0 0.0
        %324 = vmatpush1.msra.mxu0 0.0
        %325 = vmatprep.subr.mxu0 0.0
        %326 = vmatpush1.msra.mxu0 0.0
        %327 = vmatprep.subr.mxu0 0.0
        %328 = vmatpush1.msra.mxu0 0.0
        %329 = vmatprep.subr.mxu0 0.0
        %330 = vmatpush1.msra.mxu0 0.0
        %331 = vmatprep.subr.mxu0 %v315
        %332 = vmatpush1.msra.mxu0 %v314
        %333 = vmatprep.subr.mxu0 %v312
        %334 = vmatpush1.msra.mxu0 %v311
        %335 = vmatprep.subr.mxu0 %v309
        %336 = vmatpush1.msra.mxu0 %v308
        %337 = vmatprep.subr.mxu0 %v306
        %338 = vmatpush1.msra.mxu0 %v305
        %339 = vmatprep.subr.mxu0 %v303
        %340 = vmatpush1.msra.mxu0 %v302
        %341 = vmatprep.subr.mxu0 %v300
        %342 = vmatpush1.msra.mxu0 %v299
        %343 = vmatprep.subr.mxu0 %v297
        %344 = vmatpush1.msra.mxu0 %v296
        %345 = vmatprep.subr.mxu0 %v294
        %346 = vmatpush1.msra.mxu0 %v293
        %347 = vmatprep.subr.mxu0 %v291
        %348 = vmatpush1.msra.mxu0 %v290
        %349 = vmatprep.subr.mxu0 %v288
        %350 = vmatpush1.msra.mxu0 %v287
        %351 = vmatprep.subr.mxu0 %v285
        %352 = vmatpush1.msra.mxu0 %v284
        %353 = vmatprep.subr.mxu0 %v282
        %354 = vmatpush1.msra.mxu0 %v281
        %355 = vmatprep.subr.mxu0 0.0
        %356 = vmatpush2.msra.mxu0 0.0
        %357 = vmatprep.subr.mxu0 0.0
        %358 = vmatpush2.msra.mxu0 0.0
        %359 = vmatprep.subr.mxu0 0.0
        %360 = vmatpush2.msra.mxu0 0.0
        %361 = vmatprep.subr.mxu0 0.0
        %362 = vmatpush2.msra.mxu0 0.0
        %363 = vmatprep.subr.mxu0 0.0
        %364 = vmatpush2.msra.mxu0 0.0
        %365 = vmatprep.subr.mxu0 0.0
        %366 = vmatpush2.msra.mxu0 0.0
        %367 = vmatprep.subr.mxu0 0.0
        %368 = vmatpush2.msra.mxu0 0.0
        %369 = vmatprep.subr.mxu0 0.0
        %370 = vmatpush2.msra.mxu0 0.0
        %371 = vmatprep.subr.mxu0 0.0
        %372 = vmatpush2.msra.mxu0 0.0
        %373 = vmatprep.subr.mxu0 0.0
        %374 = vmatpush2.msra.mxu0 0.0
        %375 = vmatprep.subr.mxu0 0.0
        %376 = vmatpush2.msra.mxu0 0.0
        %377 = vmatprep.subr.mxu0 0.0
        %378 = vmatpush2.msra.mxu0 0.0
        %379 = vmatprep.subr.mxu0 0.0
        %380 = vmatpush2.msra.mxu0 0.0
        %381 = vmatprep.subr.mxu0 0.0
        %382 = vmatpush2.msra.mxu0 0.0
        %383 = vmatprep.subr.mxu0 0.0
        %384 = vmatpush2.msra.mxu0 0.0
        %385 = vmatprep.subr.mxu0 0.0
        %386 = vmatpush2.msra.mxu0 0.0
        %387 = vmatprep.mubr.f32.mxu0 0.0
        %388 = vmatmul.mubr.f32.gmra.mxu0 %v318
        %v389 = vpop.f32.mrf.mxu0
        %v390 = vadd.f32 0.0, %v389
        %v391 = vpop.f32.mrf.mxu0
        %v392 = vadd.f32 0.0, %v391
        %393 = vmatprep.mubr.f32.mxu0 0.0
        %394 = vmatmul.mubr.f32.gmra.mxu0 %v321
        %v395 = vpop.f32.mrf.mxu0
        %v396 = vadd.f32 0.0, %v395
        %v397 = vpop.f32.mrf.mxu0
        %v398 = vadd.f32 0.0, %v397
        %399 = vdwg.mxu0
        %400 = vmatprep.subr.mxu0 0.0
        %401 = vmatpush1.msra.mxu0 0.0
        %402 = vmatprep.subr.mxu0 0.0
        %403 = vmatpush1.msra.mxu0 0.0
        %404 = vmatprep.subr.mxu0 0.0
        %405 = vmatpush1.msra.mxu0 0.0
        %406 = vmatprep.subr.mxu0 0.0
        %407 = vmatpush1.msra.mxu0 0.0
        %408 = vmatprep.subr.mxu0 0.0
        %409 = vmatpush1.msra.mxu0 %v316
        %410 = vmatprep.subr.mxu0 0.0
        %411 = vmatpush1.msra.mxu0 %v313
        %412 = vmatprep.subr.mxu0 0.0
        %413 = vmatpush1.msra.mxu0 %v310
        %414 = vmatprep.subr.mxu0 0.0
        %415 = vmatpush1.msra.mxu0 %v307
        %416 = vmatprep.subr.mxu0 0.0
        %417 = vmatpush1.msra.mxu0 %v304
        %418 = vmatprep.subr.mxu0 0.0
        %419 = vmatpush1.msra.mxu0 %v301
        %420 = vmatprep.subr.mxu0 0.0
        %421 = vmatpush1.msra.mxu0 %v298
        %422 = vmatprep.subr.mxu0 0.0
        %423 = vmatpush1.msra.mxu0 %v295
        %424 = vmatprep.subr.mxu0 0.0
        %425 = vmatpush1.msra.mxu0 %v292
        %426 = vmatprep.subr.mxu0 0.0
        %427 = vmatpush1.msra.mxu0 %v289
        %428 = vmatprep.subr.mxu0 0.0
        %429 = vmatpush1.msra.mxu0 %v286
        %430 = vmatprep.subr.mxu0 0.0
        %431 = vmatpush1.msra.mxu0 %v283
        %432 = vmatprep.subr.mxu0 0.0
        %433 = vmatpush2.msra.mxu0 0.0
        %434 = vmatprep.subr.mxu0 0.0
        %435 = vmatpush2.msra.mxu0 0.0
        %436 = vmatprep.subr.mxu0 0.0
        %437 = vmatpush2.msra.mxu0 0.0
        %438 = vmatprep.subr.mxu0 0.0
        %439 = vmatpush2.msra.mxu0 0.0
        %440 = vmatprep.subr.mxu0 0.0
        %441 = vmatpush2.msra.mxu0 0.0
        %442 = vmatprep.subr.mxu0 0.0
        %443 = vmatpush2.msra.mxu0 0.0
        %444 = vmatprep.subr.mxu0 0.0
        %445 = vmatpush2.msra.mxu0 0.0
        %446 = vmatprep.subr.mxu0 0.0
        %447 = vmatpush2.msra.mxu0 0.0
        %448 = vmatprep.subr.mxu0 0.0
        %449 = vmatpush2.msra.mxu0 0.0
        %450 = vmatprep.subr.mxu0 0.0
        %451 = vmatpush2.msra.mxu0 0.0
        %452 = vmatprep.subr.mxu0 0.0
        %453 = vmatpush2.msra.mxu0 0.0
        %454 = vmatprep.subr.mxu0 0.0
        %455 = vmatpush2.msra.mxu0 0.0
        %456 = vmatprep.subr.mxu0 0.0
        %457 = vmatpush2.msra.mxu0 0.0
        %458 = vmatprep.subr.mxu0 0.0
        %459 = vmatpush2.msra.mxu0 0.0
        %460 = vmatprep.subr.mxu0 0.0
        %461 = vmatpush2.msra.mxu0 0.0
        %462 = vmatprep.subr.mxu0 0.0
        %463 = vmatpush2.msra.mxu0 0.0
        %464 = vmatprep.mubr.f32.mxu0 0.0
        %465 = vmatmul.mubr.f32.gmra.mxu0 %v318
        %v466 = vpop.f32.mrf.mxu0
        %v467 = vadd.f32 0.0, %v466
        %v468 = vpop.f32.mrf.mxu0
        %469 = vmatprep.mubr.f32.mxu0 0.0
        %470 = vmatmul.mubr.f32.gmra.mxu0 %v321
        %v471 = vpop.f32.mrf.mxu0
        %v472 = vadd.f32 0.0, %v471
        %v473 = vpop.f32.mrf.mxu0
        %474 = vdwg.mxu0
        %475 = vst [vmem:[%s230] sm:$0xff] %v390
        %476 = vst [vmem:[%s230 + $0x8] sm:$0xff] %v392
        %vm477 = vcmask 261120
        %478 = vst.msk [vmem:[%s230 + $0x10] sm:$0xff] %vm477, %v467
        %479 = vst [vmem:[%s230 + $0x18] sm:$0xff] %v396
        %480 = vst [vmem:[%s230 + $0x20] sm:$0xff] %v398
        %481 = vst.msk [vmem:[%s230 + $0x28] sm:$0xff] %vm477, %v472
        %s482 = sand.u32 %s119, 1
        %s483 = scalar_lea.sflag [#allocation4], %s482
        %s484 = sand.u32 %s119, 1
        %s485 = smul.addr %s484, 48
        %s486 = scalar_lea.vmem [#allocation7], %s485
        // Predicated region
        $region45: #{tpu_custom_call.1} parent=35 // pred_check
          %p487 = pneg %p129
        $region46: #{tpu_custom_call.1} parent=35 // pred_check_branch
          %489 = sbr.rel (%p487) target = $region48
        $region47: #{tpu_custom_call.1} parent=35 // pred_region
          %s490 = smul.u32 2, %s22
          %s492 = ssub.s32 768, 768
          %493 = vsyncadd %s483, %s492
          %s494 = smul.addr %s490, 3
          %s495 = smul.addr %s494, 128
          %s496 = scalar_lea.hbm %s4, %s495
          %s497 = sshll.u32 %s486, 4
          %s498 = int_to_ptr.vmem [resolvable:$true] %s497
          %503 = dma.vmem_to_hbm [thread:$0]  %s498, 768, %s496, %s483, 384, 384, 24
        $region48: #{tpu_custom_call.1} parent=35 // pred_fallthru
          _
      $region36: #{tpu_custom_call.1} parent=5 // pred_fallthru
        _
      %p504 = scmp.le.s32.totalorder 2, %s17
      // Predicated region
      $region49: #{tpu_custom_call.1} parent=5 // pred_check
        %p505 = pneg %p504
      $region50: #{tpu_custom_call.1} parent=5 // pred_check_branch
        %507 = sbr.rel (%p505) target = $region52
      $region51: #{tpu_custom_call.1} parent=5 // pred_region
        %s508 = ssub.s32 %s17, 2
        // Predicated region
        $region53: #{tpu_custom_call.1} parent=51 // pred_check
          %p509 = pneg %p135
        $region54: #{tpu_custom_call.1} parent=51 // pred_check_branch
          %511 = sbr.rel (%p509) target = $region56
        $region55: #{tpu_custom_call.1} parent=51 // pred_region
          %s512 = sand.u32 %s120, 1
          %s513 = scalar_lea.sflag [#allocation4], %s512
          %s514 = sand.u32 %s120, 1
          %s515 = smul.addr %s514, 48
          %s516 = scalar_lea.vmem [#allocation7], %s515
          %517 = dma.done %s513, 768
        $region56: #{tpu_custom_call.1} parent=51 // pred_fallthru
          _
      $region52: #{tpu_custom_call.1} parent=5 // pred_fallthru
        _
    $region6: #{tpu_custom_call.1} parent=1 // loop_footer
      %s21 = sadd.s32 1, %s17
    $region7: #{tpu_custom_call.1} parent=1 // loop_footer_branch
      %16 = sbr.rel target = $region3
    $region8: #{tpu_custom_call.1} parent=1 // loop_exit
      _
    %518 = vsyncpa [#allocation3], 1
    %s519 = scalar_lea.sflag [#allocation3], 1
    %520 = vsyncpa %s519, 1
    %521 = vsyncpa [#allocation6], 1
    %522 = vsyncpa [#allocation4], 1
    %s523 = scalar_lea.sflag [#allocation4], 1
    %524 = vsyncpa %s523, 1

</llo_original>
